<compile_context>
chip_gen: v7x
topology: tpu7x:2x2x1
jax: 0.10.0
libtpu: 0.0.40
codegen_flags: <defaults>
</compile_context>

<pallas_src>
import functools

import numpy as np

import jax
import jax.numpy as jnp
from jax.experimental import pallas as pl
from jax.experimental.pallas import tpu as pltpu


# ----------------------------------------------------------------------------
# Fused Pallas kernel: conv1+bn1+relu -> conv2+bn2+residual+relu (one image)
# ----------------------------------------------------------------------------
def _basic_block_kernel(x_ref, w1_ref, b1_ref, w2_ref, b2_ref, o_ref, pad_ref,
                        *, HP, RWC):
    """Fused BasicBlock forward for one image in packed (HP, R*W*C) layout.

    x_ref : (1, HP, RWC)   input image; lane axis packs (row-in-pack, w, c), c minor
    w1_ref: (3, RWC, RWC)  banded conv1 weights (BN1 scale folded in)
    b1_ref: (1, RWC)       folded BN1 bias, tiled over (row-in-pack, w)
    w2_ref: (3, RWC, RWC)  banded conv2 weights (BN2 scale folded in)
    b2_ref: (1, RWC)       folded BN2 bias, tiled over (row-in-pack, w)
    o_ref : (1, HP, RWC)   output
    pad_ref: (HP+2, RWC)   VMEM scratch holding the row-padded activation
    """
    f32 = jnp.float32

    # SAME padding (rows): only the two border packed rows need zeros; the
    # interior rows are fully overwritten below.  Done every step (cheap: 2 rows)
    # so it is correct even when the grid is sharded across TensorCores.
    zero_row = jnp.zeros((1, RWC), pad_ref.dtype)
    pad_ref[pl.ds(0, 1), :] = zero_row
    pad_ref[pl.ds(HP + 1, 1), :] = zero_row

    def conv3x3(w_ref, b_ref):
        # One MXU matmul per packed-row tap; the banded weight handles all
        # in-pack row taps and all column taps (incl. SAME padding in W).
        # K = N = R*W*C per matmul, f32 accumulate.
        acc = jnp.zeros((HP, RWC), f32)
        for dp in range(3):                                     # static unroll
            acc += jnp.dot(pad_ref[pl.ds(dp, HP), :], w_ref[dp],
                           preferred_element_type=f32)
        return acc + b_ref[...]

    # --- stage x into the padded scratch (residual stays in vregs) ---
    x = x_ref[0]
    pad_ref[pl.ds(1, HP), :] = x.astype(pad_ref.dtype)

    # --- conv1 + bn1 + relu ---
    y1 = jnp.maximum(conv3x3(w1_ref, b1_ref), 0.0)

    # --- re-stage y1 in the same scratch (borders still zero); never hits HBM ---
    pad_ref[pl.ds(1, HP), :] = y1.astype(pad_ref.dtype)

    # --- conv2 + bn2 + residual + relu ---
    y2 = conv3x3(w2_ref, b2_ref) + x.astype(f32)
    o_ref[...] = jnp.maximum(y2, 0.0).astype(o_ref.dtype)[None]


# ----------------------------------------------------------------------------
# Wrapper: weight folding, banded-weight construction, pallas_call plumbing
# ----------------------------------------------------------------------------
def _choose_row_pack(H, W, C, max_lanes=512):
    """Rows packed per lane-row: make the lane axis a multiple of 128 if we can,
    while keeping the banded weights (R*W*C)^2 modest."""
    wc = W * C
    for r in range(1, H + 1):
        if H % r:
            continue
        rwc = r * wc
        if rwc > max_lanes:
            break
        if rwc % 128 == 0:
            return r
    return 1


def _band_conv_weights(w_hwio, scale, W, R):
    """Fold BN scale into a 3x3 conv weight and rewrite it as banded matmul
    weights of shape (3, R*W*Cin, R*W*Cout) for the row-packed layout.

    For output packed row P, conv = sum_{dp in 0..2} pad[P+dp] @ band[dp] where
      band[dp][(ri*W + u)*Cin + ci, (ro*W + w)*Cout + co] = (w*scale)[dh, dw, ci, co]
      with dh = (dp-1)*R + ri - ro + 1 in [0,3) and dw = u - w + 1 in [0,3);
    taps that fall outside those ranges are zero (they would only ever read the
    zero SAME-padding rows/columns).
    """
    kh, kw, Cin, Cout = w_hwio.shape
    assert kh == 3 and kw == 3
    wf = w_hwio.astype(jnp.float32) * scale.astype(jnp.float32)[None, None, None, :]

    dP = np.arange(3).reshape(3, 1, 1, 1, 1, 1, 1)
    ri = np.arange(R).reshape(1, R, 1, 1, 1, 1, 1)
    u = np.arange(W).reshape(1, 1, W, 1, 1, 1, 1)
    ro = np.arange(R).reshape(1, 1, 1, R, 1, 1, 1)
    wp = np.arange(W).reshape(1, 1, 1, 1, W, 1, 1)
    dh = np.arange(3).reshape(1, 1, 1, 1, 1, 3, 1)
    dw = np.arange(3).reshape(1, 1, 1, 1, 1, 1, 3)
    sel = (((dP - 1) * R + ri - ro + 1 == dh) & (u - wp + 1 == dw))
    sel = jnp.asarray(sel.astype(np.float32))                   # (3,R,W,R,W,3,3)

    band = jnp.einsum('hdio,Pruswhd->Pruiswo', wf, sel)         # (3,R,W,Cin,R,W,Cout)
    return band.reshape(3, R * W * Cin, R * W * Cout)


def _fused_basic_block(x_packed, band1, bias1, band2, bias2, HP, RWC):
    N = x_packed.shape[0]
    kernel = functools.partial(_basic_block_kernel, HP=HP, RWC=RWC)
    return pl.pallas_call(
        kernel,
        out_shape=jax.ShapeDtypeStruct((N, HP, RWC), jnp.float32),
        grid=(N,),
        in_specs=[
            pl.BlockSpec((1, HP, RWC), lambda n: (n, 0, 0)),    # x (packed)
            pl.BlockSpec((3, RWC, RWC), lambda n: (0, 0, 0)),   # banded w1 (BN folded)
            pl.BlockSpec((1, RWC), lambda n: (0, 0)),           # bias1 (tiled)
            pl.BlockSpec((3, RWC, RWC), lambda n: (0, 0, 0)),   # banded w2 (BN folded)
            pl.BlockSpec((1, RWC), lambda n: (0, 0)),           # bias2 (tiled)
        ],
        out_specs=pl.BlockSpec((1, HP, RWC), lambda n: (n, 0, 0)),
        scratch_shapes=[pltpu.VMEM((HP + 2, RWC), x_packed.dtype)],
        compiler_params=pltpu.CompilerParams(
            dimension_semantics=("parallel",)),                 # feeds both TCs on v7x
    )(x_packed, band1, bias1, band2, bias2)


def basic_block_forward(x_nchw, params, eps=1e-5, compute_dtype=jnp.float32):
    """Equivalent of BasicBlock.forward (stride=1, downsample=None, eval-mode BN)."""
    N, C, H, W = x_nchw.shape
    assert params["w1"].shape == (3, 3, C, C) and params["w2"].shape == (3, 3, C, C)

    R = _choose_row_pack(H, W, C)        # rows packed per lane-row (2 for demo shapes)
    HP = H // R
    RWC = R * W * C

    # NCHW -> packed (N, HP, R*W*C); lane axis is (row-in-pack, w, c), c minor.
    x_packed = jnp.transpose(x_nchw, (0, 2, 3, 1)).reshape(N, HP, RWC)

    # Fold eval-mode BatchNorm: scale goes into the conv weights, bias stays.
    s1 = params["gamma1"] / jnp.sqrt(params["var1"] + eps)
    b1 = params["beta1"] - params["mean1"] * s1
    s2 = params["gamma2"] / jnp.sqrt(params["var2"] + eps)
    b2 = params["beta2"] - params["mean2"] * s2

    band1 = _band_conv_weights(params["w1"], s1, W, R)
    band2 = _band_conv_weights(params["w2"], s2, W, R)
    b1p = jnp.tile(b1, R * W).reshape(1, RWC).astype(jnp.float32)
    b2p = jnp.tile(b2, R * W).reshape(1, RWC).astype(jnp.float32)

    # On v6e/v7x with real channel counts use compute_dtype=jnp.bfloat16 (MXU-native,
    # halves activation/weight DMA); kept f32 by default for the tight accuracy check.
    x_packed = x_packed.astype(compute_dtype)
    band1 = band1.astype(compute_dtype)
    band2 = band2.astype(compute_dtype)

    out = _fused_basic_block(x_packed, band1, b1p, band2, b2p, HP, RWC)
    return jnp.transpose(out.reshape(N, H, W, C), (0, 3, 1, 2))      # -> NCHW


# ----------------------------------------------------------------------------
# Pure-JAX reference (correctness check only)
# ----------------------------------------------------------------------------
def _ref_forward(x_nchw, params, eps=1e-5):
    x = jnp.transpose(x_nchw, (0, 2, 3, 1))

    def conv(y, w):
        return jax.lax.conv_general_dilated(
            y, w, window_strides=(1, 1), padding="SAME",
            dimension_numbers=("NHWC", "HWIO", "NHWC"))

    def bn(y, g, b, m, v):
        return (y - m) / jnp.sqrt(v + eps) * g + b

    out = conv(x, params["w1"])
    out = bn(out, params["gamma1"], params["beta1"], params["mean1"], params["var1"])
    out = jnp.maximum(out, 0.0)
    out = conv(out, params["w2"])
    out = bn(out, params["gamma2"], params["beta2"], params["mean2"], params["var2"])
    out = jnp.maximum(out + x, 0.0)
    return jnp.transpose(out, (0, 3, 1, 2))


# ----------------------------------------------------------------------------
# Main
# ----------------------------------------------------------------------------
if __name__ == "__main__":
    N, C, H, W = 2, 4, 16, 16          # inplanes == planes == 4, stride=1, no downsample
    key = jax.random.PRNGKey(0)
    keys = jax.random.split(key, 11)

    x = jax.random.normal(keys[0], (N, C, H, W), jnp.float32)

    params = {
        "w1": 0.1 * jax.random.normal(keys[1], (3, 3, C, C), jnp.float32),
        "w2": 0.1 * jax.random.normal(keys[2], (3, 3, C, C), jnp.float32),
        "gamma1": 1.0 + 0.1 * jax.random.normal(keys[3], (C,), jnp.float32),
        "beta1": 0.1 * jax.random.normal(keys[4], (C,), jnp.float32),
        "mean1": 0.1 * jax.random.normal(keys[5], (C,), jnp.float32),
        "var1": 1.0 + 0.1 * jax.random.uniform(keys[6], (C,), jnp.float32),
        "gamma2": 1.0 + 0.1 * jax.random.normal(keys[7], (C,), jnp.float32),
        "beta2": 0.1 * jax.random.normal(keys[8], (C,), jnp.float32),
        "mean2": 0.1 * jax.random.normal(keys[9], (C,), jnp.float32),
        "var2": 1.0 + 0.1 * jax.random.uniform(keys[10], (C,), jnp.float32),
    }

    out = jax.jit(basic_block_forward)(x, params)
    out = jax.block_until_ready(out)

    ref = jax.block_until_ready(_ref_forward(x, params))
    assert out.shape == (N, C, H, W)
    assert jnp.allclose(out, ref, atol=1e-4, rtol=1e-4), "mismatch vs reference"

    print("KERNEL_OK")
</pallas_src>

<mosaic_0001>
module attributes {stable_mosaic.version = 11 : i64} {
  func.func @_basic_block_kernel(%arg0: i32, %arg1: memref<1x8x128xf32, #tpu.memory_space<vmem>>, %arg2: memref<3x128x128xf32, #tpu.memory_space<vmem>>, %arg3: memref<1x128xf32, #tpu.memory_space<vmem>>, %arg4: memref<3x128x128xf32, #tpu.memory_space<vmem>>, %arg5: memref<1x128xf32, #tpu.memory_space<vmem>>, %arg6: memref<1x8x128xf32, #tpu.memory_space<vmem>>, %arg7: memref<10x128xf32, #tpu.memory_space<vmem>>) attributes {dimension_semantics = [#tpu.dimension_semantics<parallel>], iteration_bounds = array<i64: 2>, scalar_prefetch = 0 : i64, scratch_operands = 1 : i64, tpu.core_type = #tpu.core_type<tc>, window_params = [{transform_indices = @transform_0, window_bounds = array<i64: 1, 8, 128>}, {pipeline_mode = #tpu.pipeline_mode<synchronous>, transform_indices = @transform_1, window_bounds = array<i64: 3, 128, 128>}, {pipeline_mode = #tpu.pipeline_mode<synchronous>, transform_indices = @transform_2, window_bounds = array<i64: 1, 128>}, {pipeline_mode = #tpu.pipeline_mode<synchronous>, transform_indices = @transform_3, window_bounds = array<i64: 3, 128, 128>}, {pipeline_mode = #tpu.pipeline_mode<synchronous>, transform_indices = @transform_4, window_bounds = array<i64: 1, 128>}, {transform_indices = @transform_5, window_bounds = array<i64: 1, 8, 128>}]} {
    %cst = arith.constant 0.000000e+00 : f32
    %0 = vector.broadcast %cst : f32 to vector<1x128xf32>
    %c0 = arith.constant 0 : index
    %c0_0 = arith.constant 0 : index
    %1 = vector.load %arg7[%c0, %c0_0] : memref<10x128xf32, #tpu.memory_space<vmem>>, vector<1x128xf32>
    tpu.vector_store %arg7[%c0, %c0_0], %0 {strides = array<i32>} : memref<10x128xf32, #tpu.memory_space<vmem>>, vector<1x128xf32>,
    %c9 = arith.constant 9 : index
    %c0_1 = arith.constant 0 : index
    %2 = vector.load %arg7[%c9, %c0_1] : memref<10x128xf32, #tpu.memory_space<vmem>>, vector<1x128xf32>
    tpu.vector_store %arg7[%c9, %c0_1], %0 {strides = array<i32>} : memref<10x128xf32, #tpu.memory_space<vmem>>, vector<1x128xf32>,
    %c0_2 = arith.constant 0 : index
    %c0_3 = arith.constant 0 : index
    %c0_4 = arith.constant 0 : index
    %3 = vector.load %arg1[%c0_2, %c0_3, %c0_4] : memref<1x8x128xf32, #tpu.memory_space<vmem>>, vector<1x8x128xf32>
    %4 = vector.shape_cast %3 : vector<1x8x128xf32> to vector<8x128xf32>
    %c1 = arith.constant 1 : index
    %c0_5 = arith.constant 0 : index
    %5 = vector.load %arg7[%c1, %c0_5] : memref<10x128xf32, #tpu.memory_space<vmem>>, vector<8x128xf32>
    tpu.vector_store %arg7[%c1, %c0_5], %4 {strides = array<i32>} : memref<10x128xf32, #tpu.memory_space<vmem>>, vector<8x128xf32>,
    %cst_6 = arith.constant 0.000000e+00 : f32
    %6 = vector.broadcast %cst_6 : f32 to vector<8x128xf32>
    %c0_7 = arith.constant 0 : index
    %c0_8 = arith.constant 0 : index
    %7 = vector.load %arg7[%c0_7, %c0_8] : memref<10x128xf32, #tpu.memory_space<vmem>>, vector<8x128xf32>
    %c0_9 = arith.constant 0 : index
    %c0_10 = arith.constant 0 : index
    %c0_11 = arith.constant 0 : index
    %8 = vector.load %arg2[%c0_9, %c0_10, %c0_11] : memref<3x128x128xf32, #tpu.memory_space<vmem>>, vector<1x128x128xf32>
    %9 = vector.shape_cast %8 : vector<1x128x128xf32> to vector<128x128xf32>
    %cst_12 = arith.constant dense<0.000000e+00> : vector<8x128xf32>
    %10 = tpu.matmul %7, %9, %cst_12 {dimension_numbers = #tpu.dot_dimension_numbers<[1], [0], [0], [1], [0, 0, 1, 1], [], []>} : vector<8x128xf32>, vector<128x128xf32>, vector<8x128xf32> -> vector<8x128xf32>
    %11 = arith.addf %6, %10 : vector<8x128xf32>
    %c1_13 = arith.constant 1 : index
    %c0_14 = arith.constant 0 : index
    %12 = vector.load %arg7[%c1_13, %c0_14] : memref<10x128xf32, #tpu.memory_space<vmem>>, vector<8x128xf32>
    %c1_15 = arith.constant 1 : index
    %c0_16 = arith.constant 0 : index
    %c0_17 = arith.constant 0 : index
    %13 = vector.load %arg2[%c1_15, %c0_16, %c0_17] : memref<3x128x128xf32, #tpu.memory_space<vmem>>, vector<1x128x128xf32>
    %14 = vector.shape_cast %13 : vector<1x128x128xf32> to vector<128x128xf32>
    %cst_18 = arith.constant dense<0.000000e+00> : vector<8x128xf32>
    %15 = tpu.matmul %12, %14, %cst_18 {dimension_numbers = #tpu.dot_dimension_numbers<[1], [0], [0], [1], [0, 0, 1, 1], [], []>} : vector<8x128xf32>, vector<128x128xf32>, vector<8x128xf32> -> vector<8x128xf32>
    %16 = arith.addf %11, %15 : vector<8x128xf32>
    %c2 = arith.constant 2 : index
    %c0_19 = arith.constant 0 : index
    %17 = vector.load %arg7[%c2, %c0_19] : memref<10x128xf32, #tpu.memory_space<vmem>>, vector<8x128xf32>
    %c2_20 = arith.constant 2 : index
    %c0_21 = arith.constant 0 : index
    %c0_22 = arith.constant 0 : index
    %18 = vector.load %arg2[%c2_20, %c0_21, %c0_22] : memref<3x128x128xf32, #tpu.memory_space<vmem>>, vector<1x128x128xf32>
    %19 = vector.shape_cast %18 : vector<1x128x128xf32> to vector<128x128xf32>
    %cst_23 = arith.constant dense<0.000000e+00> : vector<8x128xf32>
    %20 = tpu.matmul %17, %19, %cst_23 {dimension_numbers = #tpu.dot_dimension_numbers<[1], [0], [0], [1], [0, 0, 1, 1], [], []>} : vector<8x128xf32>, vector<128x128xf32>, vector<8x128xf32> -> vector<8x128xf32>
    %21 = arith.addf %16, %20 : vector<8x128xf32>
    %c0_24 = arith.constant 0 : index
    %c0_25 = arith.constant 0 : index
    %22 = vector.load %arg3[%c0_24, %c0_25] : memref<1x128xf32, #tpu.memory_space<vmem>>, vector<1x128xf32>
    %23 = vector.broadcast %22 : vector<1x128xf32> to vector<8x128xf32>
    %24 = arith.addf %21, %23 : vector<8x128xf32>
    %cst_26 = arith.constant 0.000000e+00 : f32
    %25 = vector.broadcast %cst_26 : f32 to vector<8x128xf32>
    %26 = arith.maximumf %24, %25 : vector<8x128xf32>
    %c1_27 = arith.constant 1 : index
    %c0_28 = arith.constant 0 : index
    %27 = vector.load %arg7[%c1_27, %c0_28] : memref<10x128xf32, #tpu.memory_space<vmem>>, vector<8x128xf32>
    tpu.vector_store %arg7[%c1_27, %c0_28], %26 {strides = array<i32>} : memref<10x128xf32, #tpu.memory_space<vmem>>, vector<8x128xf32>,
    %cst_29 = arith.constant 0.000000e+00 : f32
    %28 = vector.broadcast %cst_29 : f32 to vector<8x128xf32>
    %c0_30 = arith.constant 0 : index
    %c0_31 = arith.constant 0 : index
    %29 = vector.load %arg7[%c0_30, %c0_31] : memref<10x128xf32, #tpu.memory_space<vmem>>, vector<8x128xf32>
    %c0_32 = arith.constant 0 : index
    %c0_33 = arith.constant 0 : index
    %c0_34 = arith.constant 0 : index
    %30 = vector.load %arg4[%c0_32, %c0_33, %c0_34] : memref<3x128x128xf32, #tpu.memory_space<vmem>>, vector<1x128x128xf32>
    %31 = vector.shape_cast %30 : vector<1x128x128xf32> to vector<128x128xf32>
    %cst_35 = arith.constant dense<0.000000e+00> : vector<8x128xf32>
    %32 = tpu.matmul %29, %31, %cst_35 {dimension_numbers = #tpu.dot_dimension_numbers<[1], [0], [0], [1], [0, 0, 1, 1], [], []>} : vector<8x128xf32>, vector<128x128xf32>, vector<8x128xf32> -> vector<8x128xf32>
    %33 = arith.addf %28, %32 : vector<8x128xf32>
    %c1_36 = arith.constant 1 : index
    %c0_37 = arith.constant 0 : index
    %34 = vector.load %arg7[%c1_36, %c0_37] : memref<10x128xf32, #tpu.memory_space<vmem>>, vector<8x128xf32>
    %c1_38 = arith.constant 1 : index
    %c0_39 = arith.constant 0 : index
    %c0_40 = arith.constant 0 : index
    %35 = vector.load %arg4[%c1_38, %c0_39, %c0_40] : memref<3x128x128xf32, #tpu.memory_space<vmem>>, vector<1x128x128xf32>
    %36 = vector.shape_cast %35 : vector<1x128x128xf32> to vector<128x128xf32>
    %cst_41 = arith.constant dense<0.000000e+00> : vector<8x128xf32>
    %37 = tpu.matmul %34, %36, %cst_41 {dimension_numbers = #tpu.dot_dimension_numbers<[1], [0], [0], [1], [0, 0, 1, 1], [], []>} : vector<8x128xf32>, vector<128x128xf32>, vector<8x128xf32> -> vector<8x128xf32>
    %38 = arith.addf %33, %37 : vector<8x128xf32>
    %c2_42 = arith.constant 2 : index
    %c0_43 = arith.constant 0 : index
    %39 = vector.load %arg7[%c2_42, %c0_43] : memref<10x128xf32, #tpu.memory_space<vmem>>, vector<8x128xf32>
    %c2_44 = arith.constant 2 : index
    %c0_45 = arith.constant 0 : index
    %c0_46 = arith.constant 0 : index
    %40 = vector.load %arg4[%c2_44, %c0_45, %c0_46] : memref<3x128x128xf32, #tpu.memory_space<vmem>>, vector<1x128x128xf32>
    %41 = vector.shape_cast %40 : vector<1x128x128xf32> to vector<128x128xf32>
    %cst_47 = arith.constant dense<0.000000e+00> : vector<8x128xf32>
    %42 = tpu.matmul %39, %41, %cst_47 {dimension_numbers = #tpu.dot_dimension_numbers<[1], [0], [0], [1], [0, 0, 1, 1], [], []>} : vector<8x128xf32>, vector<128x128xf32>, vector<8x128xf32> -> vector<8x128xf32>
    %43 = arith.addf %38, %42 : vector<8x128xf32>
    %c0_48 = arith.constant 0 : index
    %c0_49 = arith.constant 0 : index
    %44 = vector.load %arg5[%c0_48, %c0_49] : memref<1x128xf32, #tpu.memory_space<vmem>>, vector<1x128xf32>
    %45 = vector.broadcast %44 : vector<1x128xf32> to vector<8x128xf32>
    %46 = arith.addf %43, %45 : vector<8x128xf32>
    %47 = arith.addf %46, %4 : vector<8x128xf32>
    %cst_50 = arith.constant 0.000000e+00 : f32
    %48 = vector.broadcast %cst_50 : f32 to vector<8x128xf32>
    %49 = arith.maximumf %47, %48 : vector<8x128xf32>
    %50 = vector.shape_cast %49 : vector<8x128xf32> to vector<1x8x128xf32>
    %c0_51 = arith.constant 0 : index
    %c0_52 = arith.constant 0 : index
    %c0_53 = arith.constant 0 : index
    %51 = vector.load %arg6[%c0_51, %c0_52, %c0_53] : memref<1x8x128xf32, #tpu.memory_space<vmem>>, vector<1x8x128xf32>
    tpu.vector_store %arg6[%c0_51, %c0_52, %c0_53], %50 {strides = array<i32>} : memref<1x8x128xf32, #tpu.memory_space<vmem>>, vector<1x8x128xf32>,
    return
  }
  func.func @transform_0(%arg0: i32) -> (i32, i32, i32) {
    %c0_i32 = arith.constant 0 : i32
    %c0_i32_0 = arith.constant 0 : i32
    %c0_i32_1 = arith.constant 0 : i32
    return %arg0, %c0_i32, %c0_i32_0 : i32, i32, i32
  }
  func.func @transform_1(%arg0: i32) -> (i32, i32, i32) {
    %c0_i32 = arith.constant 0 : i32
    %c0_i32_0 = arith.constant 0 : i32
    %c0_i32_1 = arith.constant 0 : i32
    %c0_i32_2 = arith.constant 0 : i32
    return %c0_i32, %c0_i32_0, %c0_i32_1 : i32, i32, i32
  }
  func.func @transform_2(%arg0: i32) -> (i32, i32) {
    %c0_i32 = arith.constant 0 : i32
    %c0_i32_0 = arith.constant 0 : i32
    %c0_i32_1 = arith.constant 0 : i32
    return %c0_i32, %c0_i32_0 : i32, i32
  }
  func.func @transform_3(%arg0: i32) -> (i32, i32, i32) {
    %c0_i32 = arith.constant 0 : i32
    %c0_i32_0 = arith.constant 0 : i32
    %c0_i32_1 = arith.constant 0 : i32
    %c0_i32_2 = arith.constant 0 : i32
    return %c0_i32, %c0_i32_0, %c0_i32_1 : i32, i32, i32
  }
  func.func @transform_4(%arg0: i32) -> (i32, i32) {
    %c0_i32 = arith.constant 0 : i32
    %c0_i32_0 = arith.constant 0 : i32
    %c0_i32_1 = arith.constant 0 : i32
    return %c0_i32, %c0_i32_0 : i32, i32
  }
  func.func @transform_5(%arg0: i32) -> (i32, i32, i32) {
    %c0_i32 = arith.constant 0 : i32
    %c0_i32_0 = arith.constant 0 : i32
    %c0_i32_1 = arith.constant 0 : i32
    return %arg0, %c0_i32, %c0_i32_0 : i32, i32, i32
  }
}

</mosaic_0001>

<llo_original>
// kernel: tile.13
$region0: #{tile.13}
  #allocation0 [shape = 's32[1]{0}', space=sflag, size = 0x4, scoped, tag = 'scoped memory for tile.13']
  %s0 = inlined_call_operand.vmem [shape: f32[4], index: 0, kind: input, shape index: {}]
  %s1 = inlined_call_operand.vmem [shape: f32[32,4], index: 1, kind: output, shape index: {}]
  // Predicated region
  $region2: #{tile.13} parent=0 // pred_check
    _
  $region3: #{tile.13} parent=0 // pred_check_branch
    %3 = sbr.rel (0) target = $region5
  $region4: #{tile.13} parent=0 // pred_region
    _
  $region5: #{tile.13} parent=0 // pred_fallthru
    _
  %v4 = vld [vmem:[%s0] ss:$0 sm:$0xff]
  %5 = vst [vmem:[%s1] sm:$0xff] %v4
  %s6 = scalar_lea.vmem %s1, 8
  %7 = vst [vmem:[%s6] sm:$0xff] %v4
  %s8 = scalar_lea.vmem %s1, 16
  %9 = vst [vmem:[%s8] sm:$0xff] %v4
  %s10 = scalar_lea.vmem %s1, 24
  %11 = vst [vmem:[%s10] sm:$0xff] %v4

// kernel: tile.14
$region0: #{tile.14}
  %s0 = inlined_call_operand.vmem [shape: f32[32,4], index: 0, kind: input, shape index: {}]
  %s1 = inlined_call_operand.vmem [shape: f32[1,128], index: 1, kind: output, shape index: {}]
  $region1: #{tile.14} parent=0
    #allocation0 [shape = 'u8[4096]{0}', space=vmem, size = 0x1000, scoped, tag = 'scoped mem for output reshape']
    %v2 = vld [vmem:[%s0] sm:$0x1]
    %vm3 = vcmask 31744
    %4 = vst.msk [vmem:[#allocation0] sm:$0x1] %vm3, %v2
    %s5 = scalar_lea.vmem %s0, 31
    %v6 = vld [vmem:[%s5] sm:$0x1]
    %7 = vrot.lane.b32.xlu0 %v6, 124
    %v8 = vpop.permute.xlu0 %7
    %vm9 = vcmask 1048544
    %10 = vst.msk [vmem:[#allocation0] sm:$0x1] %vm9, %v8
    %s11 = scalar_lea.vmem %s0, 30
    %v12 = vld [vmem:[%s11] sm:$0x1]
    %13 = vrot.lane.b32.xlu0 %v12, 120
    %v14 = vpop.permute.xlu0 %13
    %vm15 = vcmask 1015744
    %16 = vst.msk [vmem:[#allocation0] sm:$0x1] %vm15, %v14
    %s17 = scalar_lea.vmem %s0, 29
    %v18 = vld [vmem:[%s17] sm:$0x1]
    %19 = vrot.lane.b32.xlu0 %v18, 116
    %v20 = vpop.permute.xlu0 %19
    %vm21 = vcmask 982944
    %22 = vst.msk [vmem:[#allocation0] sm:$0x1] %vm21, %v20
    %s23 = scalar_lea.vmem %s0, 28
    %v24 = vld [vmem:[%s23] sm:$0x1]
    %25 = vrot.lane.b32.xlu0 %v24, 112
    %v26 = vpop.permute.xlu0 %25
    %vm27 = vcmask 950144
    %28 = vst.msk [vmem:[#allocation0] sm:$0x1] %vm27, %v26
    %s29 = scalar_lea.vmem %s0, 27
    %v30 = vld [vmem:[%s29] sm:$0x1]
    %31 = vrot.lane.b32.xlu0 %v30, 108
    %v32 = vpop.permute.xlu0 %31
    %vm33 = vcmask 917344
    %34 = vst.msk [vmem:[#allocation0] sm:$0x1] %vm33, %v32
    %s35 = scalar_lea.vmem %s0, 26
    %v36 = vld [vmem:[%s35] sm:$0x1]
    %37 = vrot.lane.b32.xlu0 %v36, 104
    %v38 = vpop.permute.xlu0 %37
    %vm39 = vcmask 884544
    %40 = vst.msk [vmem:[#allocation0] sm:$0x1] %vm39, %v38
    %s41 = scalar_lea.vmem %s0, 25
    %v42 = vld [vmem:[%s41] sm:$0x1]
    %43 = vrot.lane.b32.xlu0 %v42, 100
    %v44 = vpop.permute.xlu0 %43
    %vm45 = vcmask 851744
    %46 = vst.msk [vmem:[#allocation0] sm:$0x1] %vm45, %v44
    %s47 = scalar_lea.vmem %s0, 24
    %v48 = vld [vmem:[%s47] sm:$0x1]
    %49 = vrot.lane.b32.xlu0 %v48, 96
    %v50 = vpop.permute.xlu0 %49
    %vm51 = vcmask 818944
    %52 = vst.msk [vmem:[#allocation0] sm:$0x1] %vm51, %v50
    %s53 = scalar_lea.vmem %s0, 23
    %v54 = vld [vmem:[%s53] sm:$0x1]
    %55 = vrot.lane.b32.xlu0 %v54, 92
    %v56 = vpop.permute.xlu0 %55
    %vm57 = vcmask 786144
    %58 = vst.msk [vmem:[#allocation0] sm:$0x1] %vm57, %v56
    %s59 = scalar_lea.vmem %s0, 22
    %v60 = vld [vmem:[%s59] sm:$0x1]
    %61 = vrot.lane.b32.xlu0 %v60, 88
    %v62 = vpop.permute.xlu0 %61
    %vm63 = vcmask 753344
    %64 = vst.msk [vmem:[#allocation0] sm:$0x1] %vm63, %v62
    %s65 = scalar_lea.vmem %s0, 21
    %v66 = vld [vmem:[%s65] sm:$0x1]
    %67 = vrot.lane.b32.xlu0 %v66, 84
    %v68 = vpop.permute.xlu0 %67
    %vm69 = vcmask 720544
    %70 = vst.msk [vmem:[#allocation0] sm:$0x1] %vm69, %v68
    %s71 = scalar_lea.vmem %s0, 20
    %v72 = vld [vmem:[%s71] sm:$0x1]
    %73 = vrot.lane.b32.xlu0 %v72, 80
    %v74 = vpop.permute.xlu0 %73
    %vm75 = vcmask 687744
    %76 = vst.msk [vmem:[#allocation0] sm:$0x1] %vm75, %v74
    %s77 = scalar_lea.vmem %s0, 19
    %v78 = vld [vmem:[%s77] sm:$0x1]
    %79 = vrot.lane.b32.xlu0 %v78, 76
    %v80 = vpop.permute.xlu0 %79
    %vm81 = vcmask 654944
    %82 = vst.msk [vmem:[#allocation0] sm:$0x1] %vm81, %v80
    %s83 = scalar_lea.vmem %s0, 18
    %v84 = vld [vmem:[%s83] sm:$0x1]
    %85 = vrot.lane.b32.xlu0 %v84, 72
    %v86 = vpop.permute.xlu0 %85
    %vm87 = vcmask 622144
    %88 = vst.msk [vmem:[#allocation0] sm:$0x1] %vm87, %v86
    %s89 = scalar_lea.vmem %s0, 17
    %v90 = vld [vmem:[%s89] sm:$0x1]
    %91 = vrot.lane.b32.xlu0 %v90, 68
    %v92 = vpop.permute.xlu0 %91
    %vm93 = vcmask 589344
    %94 = vst.msk [vmem:[#allocation0] sm:$0x1] %vm93, %v92
    %s95 = scalar_lea.vmem %s0, 16
    %v96 = vld [vmem:[%s95] sm:$0x1]
    %97 = vrot.lane.b32.xlu0 %v96, 64
    %v98 = vpop.permute.xlu0 %97
    %vm99 = vcmask 556544
    %100 = vst.msk [vmem:[#allocation0] sm:$0x1] %vm99, %v98
    %s101 = scalar_lea.vmem %s0, 15
    %v102 = vld [vmem:[%s101] sm:$0x1]
    %103 = vrot.lane.b32.xlu0 %v102, 60
    %v104 = vpop.permute.xlu0 %103
    %vm105 = vcmask 523744
    %106 = vst.msk [vmem:[#allocation0] sm:$0x1] %vm105, %v104
    %s107 = scalar_lea.vmem %s0, 14
    %v108 = vld [vmem:[%s107] sm:$0x1]
    %109 = vrot.lane.b32.xlu0 %v108, 56
    %v110 = vpop.permute.xlu0 %109
    %vm111 = vcmask 490944
    %112 = vst.msk [vmem:[#allocation0] sm:$0x1] %vm111, %v110
    %s113 = scalar_lea.vmem %s0, 13
    %v114 = vld [vmem:[%s113] sm:$0x1]
    %115 = vrot.lane.b32.xlu0 %v114, 52
    %v116 = vpop.permute.xlu0 %115
    %vm117 = vcmask 458144
    %118 = vst.msk [vmem:[#allocation0] sm:$0x1] %vm117, %v116
    %s119 = scalar_lea.vmem %s0, 12
    %v120 = vld [vmem:[%s119] sm:$0x1]
    %121 = vrot.lane.b32.xlu0 %v120, 48
    %v122 = vpop.permute.xlu0 %121
    %vm123 = vcmask 425344
    %124 = vst.msk [vmem:[#allocation0] sm:$0x1] %vm123, %v122
    %s125 = scalar_lea.vmem %s0, 11
    %v126 = vld [vmem:[%s125] sm:$0x1]
    %127 = vrot.lane.b32.xlu0 %v126, 44
    %v128 = vpop.permute.xlu0 %127
    %vm129 = vcmask 392544
    %130 = vst.msk [vmem:[#allocation0] sm:$0x1] %vm129, %v128
    %s131 = scalar_lea.vmem %s0, 10
    %v132 = vld [vmem:[%s131] sm:$0x1]
    %133 = vrot.lane.b32.xlu0 %v132, 40
    %v134 = vpop.permute.xlu0 %133
    %vm135 = vcmask 359744
    %136 = vst.msk [vmem:[#allocation0] sm:$0x1] %vm135, %v134
    %s137 = scalar_lea.vmem %s0, 9
    %v138 = vld [vmem:[%s137] sm:$0x1]
    %139 = vrot.lane.b32.xlu0 %v138, 36
    %v140 = vpop.permute.xlu0 %139
    %vm141 = vcmask 326944
    %142 = vst.msk [vmem:[#allocation0] sm:$0x1] %vm141, %v140
    %s143 = scalar_lea.vmem %s0, 8
    %v144 = vld [vmem:[%s143] sm:$0x1]
    %145 = vrot.lane.b32.xlu0 %v144, 32
    %v146 = vpop.permute.xlu0 %145
    %vm147 = vcmask 294144
    %148 = vst.msk [vmem:[#allocation0] sm:$0x1] %vm147, %v146
    %s149 = scalar_lea.vmem %s0, 7
    %v150 = vld [vmem:[%s149] sm:$0x1]
    %151 = vrot.lane.b32.xlu0 %v150, 28
    %v152 = vpop.permute.xlu0 %151
    %vm153 = vcmask 261344
    %154 = vst.msk [vmem:[#allocation0] sm:$0x1] %vm153, %v152
    %s155 = scalar_lea.vmem %s0, 6
    %v156 = vld [vmem:[%s155] sm:$0x1]
    %157 = vrot.lane.b32.xlu0 %v156, 24
    %v158 = vpop.permute.xlu0 %157
    %vm159 = vcmask 228544
    %160 = vst.msk [vmem:[#allocation0] sm:$0x1] %vm159, %v158
    %s161 = scalar_lea.vmem %s0, 5
    %v162 = vld [vmem:[%s161] sm:$0x1]
    %163 = vrot.lane.b32.xlu0 %v162, 20
    %v164 = vpop.permute.xlu0 %163
    %vm165 = vcmask 195744
    %166 = vst.msk [vmem:[#allocation0] sm:$0x1] %vm165, %v164
    %s167 = scalar_lea.vmem %s0, 4
    %v168 = vld [vmem:[%s167] sm:$0x1]
    %169 = vrot.lane.b32.xlu0 %v168, 16
    %v170 = vpop.permute.xlu0 %169
    %vm171 = vcmask 162944
    %172 = vst.msk [vmem:[#allocation0] sm:$0x1] %vm171, %v170
    %s173 = scalar_lea.vmem %s0, 3
    %v174 = vld [vmem:[%s173] sm:$0x1]
    %175 = vrot.lane.b32.xlu0 %v174, 12
    %v176 = vpop.permute.xlu0 %175
    %vm177 = vcmask 130144
    %178 = vst.msk [vmem:[#allocation0] sm:$0x1] %vm177, %v176
    %s179 = scalar_lea.vmem %s0, 2
    %v180 = vld [vmem:[%s179] sm:$0x1]
    %181 = vrot.lane.b32.xlu0 %v180, 8
    %v182 = vpop.permute.xlu0 %181
    %vm183 = vcmask 97344
    %184 = vst.msk [vmem:[#allocation0] sm:$0x1] %vm183, %v182
    %s185 = scalar_lea.vmem %s0, 1
    %v186 = vld [vmem:[%s185] sm:$0x1]
    %187 = vrot.lane.b32.xlu0 %v186, 4
    %v188 = vpop.permute.xlu0 %187
    %vm189 = vcmask 64544
    %190 = vst.msk [vmem:[#allocation0] sm:$0x1] %vm189, %v188
    %s192 = sshllo.u32 0, 1
    %v194 = vld [vmem:[#allocation0] sm:%s192]
    %s195 = sshllo.u32 0, 1
    %196 = vst [vmem:[%s1] sm:%s195] %v194

// kernel: basic_block_forward.1
$region0: #{basic_block_forward.1}
  #allocation0 [shape = 'u32[]', space=smem, size = 0x4, offset = 0x4, fixed_abs, tag = 'smem constant byte address 0x4 - core index']
  #allocation1 [shape = 'u32[144,128]{1,0:T(1,128)}', space=vmem, size = 0x12000, scoped, tag = 'internal scratch']
  #allocation2 [shape = 'f32[10,128]{1,0:T(8,128)}', space=vmem, size = 0x2000, scoped, tag = 'scratch operand']
  %s0 = inlined_call_operand.vmem [shape: f32[2,8,128], index: 0, kind: input, shape index: {}]
  %s1 = inlined_call_operand.vmem [shape: f32[3,128,128], index: 1, kind: input, shape index: {}]
  %s2 = inlined_call_operand.vmem [shape: f32[1,128], index: 2, kind: input, shape index: {}]
  %s3 = inlined_call_operand.vmem [shape: f32[3,128,128], index: 3, kind: input, shape index: {}]
  %s4 = inlined_call_operand.vmem [shape: f32[1,128], index: 4, kind: input, shape index: {}]
  %s5 = inlined_call_operand.vmem [shape: f32[2,8,128], index: 5, kind: output, shape index: {}]
  %s6 = sld [smem:[#allocation0]]
  $region53: #{basic_block_forward.1} parent=0
    _
  %s8 = ssub.s32 1, %s6
  %s9 = scalar_select 0, %s8, %s6
  loop: start=0, step=1, limit=4
  $region2: #{basic_block_forward.1} parent=0 // loop_pre_header
    _
  $region3: #{basic_block_forward.1} parent=0 // loop_header
    %s11 = sphi 0, %s15
    %p12 = scmp.ge.s32.totalorder %s11, 4
    %s21 = sphi 0, %s23
    %s24 = sphi 0, %s21
    %s25 = sphi 0, %s24
    %s41 = sphi 0, %s25
    %s45 = sphi 0, %s45
    %s47 = sphi 0, %s45
    %s48 = sphi 0, %s47
    %s62 = sphi 0, %s48
    %s66 = sphi 0, %s66
    %s68 = sphi 0, %s66
    %s69 = sphi 0, %s68
    %s83 = sphi 0, %s69
    %s87 = sphi 0, %s87
    %s89 = sphi 0, %s87
    %s90 = sphi 0, %s89
    %s104 = sphi 0, %s90
    %s108 = sphi 0, %s108
    %s110 = sphi 0, %s108
    %s111 = sphi 0, %s110
    %s125 = sphi 0, %s111
    %s131 = sphi 0, %s133
    %s134 = sphi 0, %s131
    %s135 = sphi 0, %s134
    %s151 = sphi 0, %s135
  $region4: #{basic_block_forward.1} parent=0 // loop_header_branch
    %14 = sbr.rel (%p12) target = $region8
  $region5: #{basic_block_forward.1} parent=0 // loop_body
    %s16 = ssub.s32 %s11, 1
    %s17 = ssub.s32 %s11, 2
    %s18 = sadd.s32 %s11, 1
    %s19 = ssub.s32 %s11, %s18
    %p20 = scmp.eq.s32.totalorder %s19, 0
    %s22 = sadd.s32 %s21, 1
    %s23 = scalar_select %p20, %s21, %s22
    %p26 = pneg %p20
    %p27 = scmp.eq.s32.totalorder %s11, 1
    %p28 = por %p26, %p27
    %p29 = scmp.ne.s32.totalorder %s21, %s24
    %p30 = scmp.eq.s32.totalorder %s11, 0
    %p31 = por %p29, %p30
    %p32 = scmp.ne.s32.totalorder %s21, %s24
    %p33 = scmp.eq.s32.totalorder %s16, 1
    %p34 = por %p32, %p33
    %p35 = scmp.ne.s32.totalorder %s24, %s25
    %p36 = scmp.eq.s32.totalorder %s16, 0
    %p37 = por %p35, %p36
    %p38 = scmp.ne.s32.totalorder %s24, %s25
    %p39 = scmp.eq.s32.totalorder %s17, 1
    %p40 = por %p38, %p39
    %p42 = scmp.ne.s32.totalorder %s25, %s41
    %p43 = scmp.eq.s32.totalorder %s17, 0
    %p44 = por %p42, %p43
    %s46 = sadd.s32 %s45, 1
    %p49 = scmp.eq.s32.totalorder %s11, 1
    %p50 = scmp.ne.s32.totalorder %s45, %s47
    %p51 = scmp.eq.s32.totalorder %s11, 0
    %p52 = por %p50, %p51
    %p53 = scmp.ne.s32.totalorder %s45, %s47
    %p54 = scmp.eq.s32.totalorder %s16, 1
    %p55 = por %p53, %p54
    %p56 = scmp.ne.s32.totalorder %s47, %s48
    %p57 = scmp.eq.s32.totalorder %s16, 0
    %p58 = por %p56, %p57
    %p59 = scmp.ne.s32.totalorder %s47, %s48
    %p60 = scmp.eq.s32.totalorder %s17, 1
    %p61 = por %p59, %p60
    %p63 = scmp.ne.s32.totalorder %s48, %s62
    %p64 = scmp.eq.s32.totalorder %s17, 0
    %p65 = por %p63, %p64
    %s67 = sadd.s32 %s66, 1
    %p70 = scmp.eq.s32.totalorder %s11, 1
    %p71 = scmp.ne.s32.totalorder %s66, %s68
    %p72 = scmp.eq.s32.totalorder %s11, 0
    %p73 = por %p71, %p72
    %p74 = scmp.ne.s32.totalorder %s66, %s68
    %p75 = scmp.eq.s32.totalorder %s16, 1
    %p76 = por %p74, %p75
    %p77 = scmp.ne.s32.totalorder %s68, %s69
    %p78 = scmp.eq.s32.totalorder %s16, 0
    %p79 = por %p77, %p78
    %p80 = scmp.ne.s32.totalorder %s68, %s69
    %p81 = scmp.eq.s32.totalorder %s17, 1
    %p82 = por %p80, %p81
    %p84 = scmp.ne.s32.totalorder %s69, %s83
    %p85 = scmp.eq.s32.totalorder %s17, 0
    %p86 = por %p84, %p85
    %s88 = sadd.s32 %s87, 1
    %p91 = scmp.eq.s32.totalorder %s11, 1
    %p92 = scmp.ne.s32.totalorder %s87, %s89
    %p93 = scmp.eq.s32.totalorder %s11, 0
    %p94 = por %p92, %p93
    %p95 = scmp.ne.s32.totalorder %s87, %s89
    %p96 = scmp.eq.s32.totalorder %s16, 1
    %p97 = por %p95, %p96
    %p98 = scmp.ne.s32.totalorder %s89, %s90
    %p99 = scmp.eq.s32.totalorder %s16, 0
    %p100 = por %p98, %p99
    %p101 = scmp.ne.s32.totalorder %s89, %s90
    %p102 = scmp.eq.s32.totalorder %s17, 1
    %p103 = por %p101, %p102
    %p105 = scmp.ne.s32.totalorder %s90, %s104
    %p106 = scmp.eq.s32.totalorder %s17, 0
    %p107 = por %p105, %p106
    %s109 = sadd.s32 %s108, 1
    %p112 = scmp.eq.s32.totalorder %s11, 1
    %p113 = scmp.ne.s32.totalorder %s108, %s110
    %p114 = scmp.eq.s32.totalorder %s11, 0
    %p115 = por %p113, %p114
    %p116 = scmp.ne.s32.totalorder %s108, %s110
    %p117 = scmp.eq.s32.totalorder %s16, 1
    %p118 = por %p116, %p117
    %p119 = scmp.ne.s32.totalorder %s110, %s111
    %p120 = scmp.eq.s32.totalorder %s16, 0
    %p121 = por %p119, %p120
    %p122 = scmp.ne.s32.totalorder %s110, %s111
    %p123 = scmp.eq.s32.totalorder %s17, 1
    %p124 = por %p122, %p123
    %p126 = scmp.ne.s32.totalorder %s111, %s125
    %p127 = scmp.eq.s32.totalorder %s17, 0
    %p128 = por %p126, %p127
    %s129 = ssub.s32 %s11, %s18
    %p130 = scmp.eq.s32.totalorder %s129, 0
    %s132 = sadd.s32 %s131, 1
    %s133 = scalar_select %p130, %s131, %s132
    %p136 = pneg %p130
    %p137 = scmp.eq.s32.totalorder %s11, 1
    %p138 = por %p136, %p137
    %p139 = scmp.ne.s32.totalorder %s131, %s134
    %p140 = scmp.eq.s32.totalorder %s11, 0
    %p141 = por %p139, %p140
    %p142 = scmp.ne.s32.totalorder %s131, %s134
    %p143 = scmp.eq.s32.totalorder %s16, 1
    %p144 = por %p142, %p143
    %p145 = scmp.ne.s32.totalorder %s134, %s135
    %p146 = scmp.eq.s32.totalorder %s16, 0
    %p147 = por %p145, %p146
    %p148 = scmp.ne.s32.totalorder %s134, %s135
    %p149 = scmp.eq.s32.totalorder %s17, 1
    %p150 = por %p148, %p149
    %p152 = scmp.ne.s32.totalorder %s135, %s151
    %p153 = scmp.eq.s32.totalorder %s17, 0
    %p154 = por %p152, %p153
    %p155 = scmp.le.s32.totalorder 1, %s11
    %p156 = scmp.lt.s32.totalorder %s11, 3
    %p157 = pnand %p155, %p156
    %p158 = pneg %p157
    // Predicated region
    $region9: #{basic_block_forward.1} parent=5 // pred_check
      _
    $region10: #{basic_block_forward.1} parent=5 // pred_check_branch
      %160 = sbr.rel (%p157) target = $region12
    $region11: #{basic_block_forward.1} parent=5 // pred_region
      %s161 = ssub.s32 %s11, 1
      // Predicated region
      $region13: #{basic_block_forward.1} parent=11 // pred_check
        %p162 = pneg %p58
      $region14: #{basic_block_forward.1} parent=11 // pred_check_branch
        %164 = sbr.rel (%p162) target = $region16
      $region15: #{basic_block_forward.1} parent=11 // pred_region
        _
      $region16: #{basic_block_forward.1} parent=11 // pred_fallthru
        _
      // Predicated region
      $region17: #{basic_block_forward.1} parent=11 // pred_check
        %p165 = pneg %p79
      $region18: #{basic_block_forward.1} parent=11 // pred_check_branch
        %167 = sbr.rel (%p165) target = $region20
      $region19: #{basic_block_forward.1} parent=11 // pred_region
        _
      $region20: #{basic_block_forward.1} parent=11 // pred_fallthru
        _
      // Predicated region
      $region21: #{basic_block_forward.1} parent=11 // pred_check
        %p168 = pneg %p100
      $region22: #{basic_block_forward.1} parent=11 // pred_check_branch
        %170 = sbr.rel (%p168) target = $region24
      $region23: #{basic_block_forward.1} parent=11 // pred_region
        _
      $region24: #{basic_block_forward.1} parent=11 // pred_fallthru
        _
      // Predicated region
      $region25: #{basic_block_forward.1} parent=11 // pred_check
        %p171 = pneg %p121
      $region26: #{basic_block_forward.1} parent=11 // pred_check_branch
        %173 = sbr.rel (%p171) target = $region28
      $region27: #{basic_block_forward.1} parent=11 // pred_region
        _
      $region28: #{basic_block_forward.1} parent=11 // pred_fallthru
        _
    $region12: #{basic_block_forward.1} parent=5 // pred_fallthru
      _
    %p174 = scmp.lt.s32.totalorder %s11, 2
    // Predicated region
    $region29: #{basic_block_forward.1} parent=5 // pred_check
      %p175 = pneg %p174
    $region30: #{basic_block_forward.1} parent=5 // pred_check_branch
      %177 = sbr.rel (%p175) target = $region32
    $region31: #{basic_block_forward.1} parent=5 // pred_region
      // Predicated region
      $region33: #{basic_block_forward.1} parent=31 // pred_check
        %p178 = pneg %p31
      $region34: #{basic_block_forward.1} parent=31 // pred_check_branch
        %180 = sbr.rel (%p178) target = $region36
      $region35: #{basic_block_forward.1} parent=31 // pred_region
        %p181 = scmp.lt.s32.totalorder %s11, 1
        %s182 = scalar_select %p181, %s11, 1
        %s183 = smul.addr %s182, 8
        %s184 = scalar_lea.vmem %s0, %s183
      $region36: #{basic_block_forward.1} parent=31 // pred_fallthru
        _
    $region32: #{basic_block_forward.1} parent=5 // pred_fallthru
      _
    %p185 = scmp.le.s32.totalorder 1, %s11
    %p186 = scmp.lt.s32.totalorder %s11, 3
    %p187 = pnand %p185, %p186
    %p188 = pneg %p187
    // Predicated region
    $region37: #{basic_block_forward.1} parent=5 // pred_check
      _
    $region38: #{basic_block_forward.1} parent=5 // pred_check_branch
      %190 = sbr.rel (%p187) target = $region40
    $region39: #{basic_block_forward.1} parent=5 // pred_region
      %s191 = ssub.s32 %s11, 1
      %p192 = scmp.lt.s32.totalorder %s16, 1
      %s193 = scalar_select %p192, %s16, 1
      %s194 = smul.addr %s193, 8
      %s195 = scalar_lea.vmem %s0, %s194
      %p196 = pneg %p37
      %p197 = pneg %p34
      %p198 = pneg %p58
      %p199 = pneg %p55
      %p200 = pneg %p79
      %p201 = pneg %p76
      %p202 = pneg %p100
      %p203 = pneg %p97
      %p204 = pneg %p121
      %p205 = pneg %p118
      %p206 = pneg %p147
      %p207 = pneg %p144
      %p208 = scmp.lt.s32.totalorder %s16, 1
      %s209 = scalar_select %p208, %s16, 1
      %s210 = smul.addr %s209, 8
      %s211 = scalar_lea.vmem %s5, %s210
      %p212 = scmp.lt.s32.totalorder %s16, 1
      %s213 = scalar_select %p212, %s16, 1
      %s214 = smul.addr %s213, 8
      %s215 = scalar_lea.vmem %s0, %s214
      %p216 = scmp.lt.s32.totalorder %s16, 1
      %s217 = scalar_select %p216, %s16, 1
      %s218 = smul.addr %s217, 8
      %s219 = scalar_lea.vmem %s5, %s218
      %220 = vst [vmem:[#allocation2] sm:$0x1] 0.0
      %221 = vst [vmem:[#allocation2 + $0x9] sm:$0x1] 0.0
      %v222 = vld [vmem:[%s215] sm:$0xff]
      %223 = vst [vmem:[#allocation2 + $0x1] sm:$0xff] %v222
      %v224 = vld [vmem:[#allocation2] sm:$0xff]
      %v225 = vld [vmem:[%s1] sm:$0xff]
      %v226 = vld [vmem:[%s1 + $0x8] sm:$0xff]
      %v227 = vld [vmem:[%s1 + $0x10] sm:$0xff]
      %v228 = vld [vmem:[%s1 + $0x18] sm:$0xff]
      %v229 = vld [vmem:[%s1 + $0x20] sm:$0xff]
      %v230 = vld [vmem:[%s1 + $0x28] sm:$0xff]
      %v231 = vld [vmem:[%s1 + $0x30] sm:$0xff]
      %v232 = vld [vmem:[%s1 + $0x38] sm:$0xff]
      %v233 = vld [vmem:[%s1 + $0x40] sm:$0xff]
      %v234 = vld [vmem:[%s1 + $0x48] sm:$0xff]
      %v235 = vld [vmem:[%s1 + $0x50] sm:$0xff]
      %v236 = vld [vmem:[%s1 + $0x58] sm:$0xff]
      %v237 = vld [vmem:[%s1 + $0x60] sm:$0xff]
      %v238 = vld [vmem:[%s1 + $0x68] sm:$0xff]
      %v239 = vld [vmem:[%s1 + $0x70] sm:$0xff]
      %v240 = vld [vmem:[%s1 + $0x78] sm:$0xff]
      %v241 = vld [vmem:[#allocation2 + $0x1] sm:$0xff]
      %s242 = scalar_lea.vmem %s1, 128
      %v243 = vld [vmem:[%s242] sm:$0xff]
      %v244 = vld [vmem:[%s242 + $0x8] sm:$0xff]
      %v245 = vld [vmem:[%s242 + $0x10] sm:$0xff]
      %v246 = vld [vmem:[%s242 + $0x18] sm:$0xff]
      %v247 = vld [vmem:[%s242 + $0x20] sm:$0xff]
      %v248 = vld [vmem:[%s242 + $0x28] sm:$0xff]
      %v249 = vld [vmem:[%s242 + $0x30] sm:$0xff]
      %v250 = vld [vmem:[%s242 + $0x38] sm:$0xff]
      %v251 = vld [vmem:[%s242 + $0x40] sm:$0xff]
      %v252 = vld [vmem:[%s242 + $0x48] sm:$0xff]
      %v253 = vld [vmem:[%s242 + $0x50] sm:$0xff]
      %v254 = vld [vmem:[%s242 + $0x58] sm:$0xff]
      %v255 = vld [vmem:[%s242 + $0x60] sm:$0xff]
      %v256 = vld [vmem:[%s242 + $0x68] sm:$0xff]
      %v257 = vld [vmem:[%s242 + $0x70] sm:$0xff]
      %v258 = vld [vmem:[%s242 + $0x78] sm:$0xff]
      %259 = vmatprep.subr.mxu0 0.0
      %260 = vmatpush1.msra.mxu0 %v243
      %261 = vmatprep.subr.mxu0 0.0
      %262 = vmatpush1.msra.mxu0 %v244
      %263 = vmatprep.subr.mxu0 0.0
      %264 = vmatpush1.msra.mxu0 %v245
      %265 = vmatprep.subr.mxu0 0.0
      %266 = vmatpush1.msra.mxu0 %v246
      %267 = vmatprep.subr.mxu0 0.0
      %268 = vmatpush1.msra.mxu0 %v247
      %269 = vmatprep.subr.mxu0 0.0
      %270 = vmatpush1.msra.mxu0 %v248
      %271 = vmatprep.subr.mxu0 0.0
      %272 = vmatpush1.msra.mxu0 %v249
      %273 = vmatprep.subr.mxu0 0.0
      %274 = vmatpush1.msra.mxu0 %v250
      %275 = vmatprep.subr.mxu0 0.0
      %276 = vmatpush1.msra.mxu0 %v251
      %277 = vmatprep.subr.mxu0 0.0
      %278 = vmatpush1.msra.mxu0 %v252
      %279 = vmatprep.subr.mxu0 0.0
      %280 = vmatpush1.msra.mxu0 %v253
      %281 = vmatprep.subr.mxu0 0.0
      %282 = vmatpush1.msra.mxu0 %v254
      %283 = vmatprep.subr.mxu0 0.0
      %284 = vmatpush1.msra.mxu0 %v255
      %285 = vmatprep.subr.mxu0 0.0
      %286 = vmatpush1.msra.mxu0 %v256
      %287 = vmatprep.subr.mxu0 0.0
      %288 = vmatpush1.msra.mxu0 %v257
      %289 = vmatprep.subr.mxu0 0.0
      %290 = vmatpush1.msra.mxu0 %v258
      %291 = vmatprep.subr.mxu0 0.0
      %292 = vmatpush1.msra.mxu0 0.0
      %293 = vmatprep.subr.mxu0 0.0
      %294 = vmatpush1.msra.mxu0 0.0
      %295 = vmatprep.subr.mxu0 0.0
      %296 = vmatpush1.msra.mxu0 0.0
      %297 = vmatprep.subr.mxu0 0.0
      %298 = vmatpush1.msra.mxu0 0.0
      %299 = vmatprep.subr.mxu0 0.0
      %300 = vmatpush1.msra.mxu0 0.0
      %301 = vmatprep.subr.mxu0 0.0
      %302 = vmatpush1.msra.mxu0 0.0
      %303 = vmatprep.subr.mxu0 0.0
      %304 = vmatpush1.msra.mxu0 0.0
      %305 = vmatprep.subr.mxu0 0.0
      %306 = vmatpush1.msra.mxu0 0.0
      %307 = vmatprep.subr.mxu0 0.0
      %308 = vmatpush1.msra.mxu0 0.0
      %309 = vmatprep.subr.mxu0 0.0
      %310 = vmatpush1.msra.mxu0 0.0
      %311 = vmatprep.subr.mxu0 0.0
      %312 = vmatpush1.msra.mxu0 0.0
      %313 = vmatprep.subr.mxu0 0.0
      %314 = vmatpush1.msra.mxu0 0.0
      %315 = vmatprep.subr.mxu0 0.0
      %316 = vmatpush1.msra.mxu0 0.0
      %317 = vmatprep.subr.mxu0 0.0
      %318 = vmatpush1.msra.mxu0 0.0
      %319 = vmatprep.subr.mxu0 0.0
      %320 = vmatpush1.msra.mxu0 0.0
      %321 = vmatprep.subr.mxu0 0.0
      %322 = vmatpush1.msra.mxu0 0.0
      %323 = vmatprep.mubr.f32.mxu0 0.0
      %324 = vmatmul.mubr.f32.gmra.mrb[0].mxu0 %v241
      %v325 = vpop.f32.mrb[0].mxu0
      %v326 = vadd.f32 0.0, %v325
      %v327 = vpop.f32.mrb[0].mxu0
      %328 = vdwg.mxu0
      %329 = vmatprep.subr.mxu0 0.0
      %330 = vmatpush1.msra.mxu0 %v225
      %331 = vmatprep.subr.mxu0 0.0
      %332 = vmatpush1.msra.mxu0 %v226
      %333 = vmatprep.subr.mxu0 0.0
      %334 = vmatpush1.msra.mxu0 %v227
      %335 = vmatprep.subr.mxu0 0.0
      %336 = vmatpush1.msra.mxu0 %v228
      %337 = vmatprep.subr.mxu0 0.0
      %338 = vmatpush1.msra.mxu0 %v229
      %339 = vmatprep.subr.mxu0 0.0
      %340 = vmatpush1.msra.mxu0 %v230
      %341 = vmatprep.subr.mxu0 0.0
      %342 = vmatpush1.msra.mxu0 %v231
      %343 = vmatprep.subr.mxu0 0.0
      %344 = vmatpush1.msra.mxu0 %v232
      %345 = vmatprep.subr.mxu0 0.0
      %346 = vmatpush1.msra.mxu0 %v233
      %347 = vmatprep.subr.mxu0 0.0
      %348 = vmatpush1.msra.mxu0 %v234
      %349 = vmatprep.subr.mxu0 0.0
      %350 = vmatpush1.msra.mxu0 %v235
      %351 = vmatprep.subr.mxu0 0.0
      %352 = vmatpush1.msra.mxu0 %v236
      %353 = vmatprep.subr.mxu0 0.0
      %354 = vmatpush1.msra.mxu0 %v237
      %355 = vmatprep.subr.mxu0 0.0
      %356 = vmatpush1.msra.mxu0 %v238
      %357 = vmatprep.subr.mxu0 0.0
      %358 = vmatpush1.msra.mxu0 %v239
      %359 = vmatprep.subr.mxu0 0.0
      %360 = vmatpush1.msra.mxu0 %v240
      %361 = vmatprep.subr.mxu0 0.0
      %362 = vmatpush1.msra.mxu0 0.0
      %363 = vmatprep.subr.mxu0 0.0
      %364 = vmatpush1.msra.mxu0 0.0
      %365 = vmatprep.subr.mxu0 0.0
      %366 = vmatpush1.msra.mxu0 0.0
      %367 = vmatprep.subr.mxu0 0.0
      %368 = vmatpush1.msra.mxu0 0.0
      %369 = vmatprep.subr.mxu0 0.0
      %370 = vmatpush1.msra.mxu0 0.0
      %371 = vmatprep.subr.mxu0 0.0
      %372 = vmatpush1.msra.mxu0 0.0
      %373 = vmatprep.subr.mxu0 0.0
      %374 = vmatpush1.msra.mxu0 0.0
      %375 = vmatprep.subr.mxu0 0.0
      %376 = vmatpush1.msra.mxu0 0.0
      %377 = vmatprep.subr.mxu0 0.0
      %378 = vmatpush1.msra.mxu0 0.0
      %379 = vmatprep.subr.mxu0 0.0
      %380 = vmatpush1.msra.mxu0 0.0
      %381 = vmatprep.subr.mxu0 0.0
      %382 = vmatpush1.msra.mxu0 0.0
      %383 = vmatprep.subr.mxu0 0.0
      %384 = vmatpush1.msra.mxu0 0.0
      %385 = vmatprep.subr.mxu0 0.0
      %386 = vmatpush1.msra.mxu0 0.0
      %387 = vmatprep.subr.mxu0 0.0
      %388 = vmatpush1.msra.mxu0 0.0
      %389 = vmatprep.subr.mxu0 0.0
      %390 = vmatpush1.msra.mxu0 0.0
      %391 = vmatprep.subr.mxu0 0.0
      %392 = vmatpush1.msra.mxu0 0.0
      %393 = vmatprep.mubr.f32.mxu0 0.0
      %394 = vmatmul.mubr.f32.gmra.mrb[0].mxu0 %v224
      %v395 = vpop.f32.mrb[0].mxu0
      %v396 = vadd.f32 %v326, %v395
      %v397 = vpop.f32.mrb[0].mxu0
      %398 = vdwg.mxu0
      %v399 = vld [vmem:[#allocation2 + $0x2] sm:$0xff]
      %s400 = scalar_lea.vmem %s1, 256
      %v401 = vld [vmem:[%s400] sm:$0xff]
      %v402 = vld [vmem:[%s400 + $0x8] sm:$0xff]
      %v403 = vld [vmem:[%s400 + $0x10] sm:$0xff]
      %v404 = vld [vmem:[%s400 + $0x18] sm:$0xff]
      %v405 = vld [vmem:[%s400 + $0x20] sm:$0xff]
      %v406 = vld [vmem:[%s400 + $0x28] sm:$0xff]
      %v407 = vld [vmem:[%s400 + $0x30] sm:$0xff]
      %v408 = vld [vmem:[%s400 + $0x38] sm:$0xff]
      %v409 = vld [vmem:[%s400 + $0x40] sm:$0xff]
      %v410 = vld [vmem:[%s400 + $0x48] sm:$0xff]
      %v411 = vld [vmem:[%s400 + $0x50] sm:$0xff]
      %v412 = vld [vmem:[%s400 + $0x58] sm:$0xff]
      %v413 = vld [vmem:[%s400 + $0x60] sm:$0xff]
      %v414 = vld [vmem:[%s400 + $0x68] sm:$0xff]
      %v415 = vld [vmem:[%s400 + $0x70] sm:$0xff]
      %v416 = vld [vmem:[%s400 + $0x78] sm:$0xff]
      %417 = vmatprep.subr.mxu0 0.0
      %418 = vmatpush1.msra.mxu0 %v401
      %419 = vmatprep.subr.mxu0 0.0
      %420 = vmatpush1.msra.mxu0 %v402
      %421 = vmatprep.subr.mxu0 0.0
      %422 = vmatpush1.msra.mxu0 %v403
      %423 = vmatprep.subr.mxu0 0.0
      %424 = vmatpush1.msra.mxu0 %v404
      %425 = vmatprep.subr.mxu0 0.0
      %426 = vmatpush1.msra.mxu0 %v405
      %427 = vmatprep.subr.mxu0 0.0
      %428 = vmatpush1.msra.mxu0 %v406
      %429 = vmatprep.subr.mxu0 0.0
      %430 = vmatpush1.msra.mxu0 %v407
      %431 = vmatprep.subr.mxu0 0.0
      %432 = vmatpush1.msra.mxu0 %v408
      %433 = vmatprep.subr.mxu0 0.0
      %434 = vmatpush1.msra.mxu0 %v409
      %435 = vmatprep.subr.mxu0 0.0
      %436 = vmatpush1.msra.mxu0 %v410
      %437 = vmatprep.subr.mxu0 0.0
      %438 = vmatpush1.msra.mxu0 %v411
      %439 = vmatprep.subr.mxu0 0.0
      %440 = vmatpush1.msra.mxu0 %v412
      %441 = vmatprep.subr.mxu0 0.0
      %442 = vmatpush1.msra.mxu0 %v413
      %443 = vmatprep.subr.mxu0 0.0
      %444 = vmatpush1.msra.mxu0 %v414
      %445 = vmatprep.subr.mxu0 0.0
      %446 = vmatpush1.msra.mxu0 %v415
      %447 = vmatprep.subr.mxu0 0.0
      %448 = vmatpush1.msra.mxu0 %v416
      %449 = vmatprep.subr.mxu0 0.0
      %450 = vmatpush1.msra.mxu0 0.0
      %451 = vmatprep.subr.mxu0 0.0
      %452 = vmatpush1.msra.mxu0 0.0
      %453 = vmatprep.subr.mxu0 0.0
      %454 = vmatpush1.msra.mxu0 0.0
      %455 = vmatprep.subr.mxu0 0.0
      %456 = vmatpush1.msra.mxu0 0.0
      %457 = vmatprep.subr.mxu0 0.0
      %458 = vmatpush1.msra.mxu0 0.0
      %459 = vmatprep.subr.mxu0 0.0
      %460 = vmatpush1.msra.mxu0 0.0
      %461 = vmatprep.subr.mxu0 0.0
      %462 = vmatpush1.msra.mxu0 0.0
      %463 = vmatprep.subr.mxu0 0.0
      %464 = vmatpush1.msra.mxu0 0.0
      %465 = vmatprep.subr.mxu0 0.0
      %466 = vmatpush1.msra.mxu0 0.0
      %467 = vmatprep.subr.mxu0 0.0
      %468 = vmatpush1.msra.mxu0 0.0
      %469 = vmatprep.subr.mxu0 0.0
      %470 = vmatpush1.msra.mxu0 0.0
      %471 = vmatprep.subr.mxu0 0.0
      %472 = vmatpush1.msra.mxu0 0.0
      %473 = vmatprep.subr.mxu0 0.0
      %474 = vmatpush1.msra.mxu0 0.0
      %475 = vmatprep.subr.mxu0 0.0
      %476 = vmatpush1.msra.mxu0 0.0
      %477 = vmatprep.subr.mxu0 0.0
      %478 = vmatpush1.msra.mxu0 0.0
      %479 = vmatprep.subr.mxu0 0.0
      %480 = vmatpush1.msra.mxu0 0.0
      %481 = vmatprep.mubr.f32.mxu0 0.0
      %482 = vmatmul.mubr.f32.gmra.mrb[0].mxu0 %v399
      %v483 = vpop.f32.mrb[0].mxu0
      %v484 = vadd.f32 0.0, %v483
      %v485 = vpop.f32.mrb[0].mxu0
      %486 = vdwg.mxu0
      %v487 = vadd.f32 %v396, %v484
      %v488 = vld [vmem:[%s2] sm:$0x1]
      %v490 = vlaneseq
      %v491 = vshrl.u32 %v490, 7
      %v492 = vsub.s32 0, %v491
      %v493 = vrot.slane %v488, %v492
      %v495 = vadd.f32 %v487, %v493
      %v496 = vmax.f32 %v495, 0.0
      %497 = vst [vmem:[#allocation2 + $0x1] sm:$0xff] %v496
      %v498 = vld [vmem:[#allocation2] sm:$0xff]
      %v499 = vld [vmem:[%s3] sm:$0xff]
      %v500 = vld [vmem:[%s3 + $0x8] sm:$0xff]
      %v501 = vld [vmem:[%s3 + $0x10] sm:$0xff]
      %v502 = vld [vmem:[%s3 + $0x18] sm:$0xff]
      %v503 = vld [vmem:[%s3 + $0x20] sm:$0xff]
      %v504 = vld [vmem:[%s3 + $0x28] sm:$0xff]
      %v505 = vld [vmem:[%s3 + $0x30] sm:$0xff]
      %v506 = vld [vmem:[%s3 + $0x38] sm:$0xff]
      %v507 = vld [vmem:[%s3 + $0x40] sm:$0xff]
      %v508 = vld [vmem:[%s3 + $0x48] sm:$0xff]
      %v509 = vld [vmem:[%s3 + $0x50] sm:$0xff]
      %v510 = vld [vmem:[%s3 + $0x58] sm:$0xff]
      %v511 = vld [vmem:[%s3 + $0x60] sm:$0xff]
      %v512 = vld [vmem:[%s3 + $0x68] sm:$0xff]
      %v513 = vld [vmem:[%s3 + $0x70] sm:$0xff]
      %v514 = vld [vmem:[%s3 + $0x78] sm:$0xff]
      %v515 = vld [vmem:[#allocation2 + $0x1] sm:$0xff]
      %s516 = scalar_lea.vmem %s3, 128
      %v517 = vld [vmem:[%s516] sm:$0xff]
      %v518 = vld [vmem:[%s516 + $0x8] sm:$0xff]
      %v519 = vld [vmem:[%s516 + $0x10] sm:$0xff]
      %v520 = vld [vmem:[%s516 + $0x18] sm:$0xff]
      %v521 = vld [vmem:[%s516 + $0x20] sm:$0xff]
      %v522 = vld [vmem:[%s516 + $0x28] sm:$0xff]
      %v523 = vld [vmem:[%s516 + $0x30] sm:$0xff]
      %v524 = vld [vmem:[%s516 + $0x38] sm:$0xff]
      %v525 = vld [vmem:[%s516 + $0x40] sm:$0xff]
      %v526 = vld [vmem:[%s516 + $0x48] sm:$0xff]
      %v527 = vld [vmem:[%s516 + $0x50] sm:$0xff]
      %v528 = vld [vmem:[%s516 + $0x58] sm:$0xff]
      %v529 = vld [vmem:[%s516 + $0x60] sm:$0xff]
      %v530 = vld [vmem:[%s516 + $0x68] sm:$0xff]
      %v531 = vld [vmem:[%s516 + $0x70] sm:$0xff]
      %v532 = vld [vmem:[%s516 + $0x78] sm:$0xff]
      %533 = vmatprep.subr.mxu0 0.0
      %534 = vmatpush1.msra.mxu0 %v517
      %535 = vmatprep.subr.mxu0 0.0
      %536 = vmatpush1.msra.mxu0 %v518
      %537 = vmatprep.subr.mxu0 0.0
      %538 = vmatpush1.msra.mxu0 %v519
      %539 = vmatprep.subr.mxu0 0.0
      %540 = vmatpush1.msra.mxu0 %v520
      %541 = vmatprep.subr.mxu0 0.0
      %542 = vmatpush1.msra.mxu0 %v521
      %543 = vmatprep.subr.mxu0 0.0
      %544 = vmatpush1.msra.mxu0 %v522
      %545 = vmatprep.subr.mxu0 0.0
      %546 = vmatpush1.msra.mxu0 %v523
      %547 = vmatprep.subr.mxu0 0.0
      %548 = vmatpush1.msra.mxu0 %v524
      %549 = vmatprep.subr.mxu0 0.0
      %550 = vmatpush1.msra.mxu0 %v525
      %551 = vmatprep.subr.mxu0 0.0
      %552 = vmatpush1.msra.mxu0 %v526
      %553 = vmatprep.subr.mxu0 0.0
      %554 = vmatpush1.msra.mxu0 %v527
      %555 = vmatprep.subr.mxu0 0.0
      %556 = vmatpush1.msra.mxu0 %v528
      %557 = vmatprep.subr.mxu0 0.0
      %558 = vmatpush1.msra.mxu0 %v529
      %559 = vmatprep.subr.mxu0 0.0
      %560 = vmatpush1.msra.mxu0 %v530
      %561 = vmatprep.subr.mxu0 0.0
      %562 = vmatpush1.msra.mxu0 %v531
      %563 = vmatprep.subr.mxu0 0.0
      %564 = vmatpush1.msra.mxu0 %v532
      %565 = vmatprep.subr.mxu0 0.0
      %566 = vmatpush1.msra.mxu0 0.0
      %567 = vmatprep.subr.mxu0 0.0
      %568 = vmatpush1.msra.mxu0 0.0
      %569 = vmatprep.subr.mxu0 0.0
      %570 = vmatpush1.msra.mxu0 0.0
      %571 = vmatprep.subr.mxu0 0.0
      %572 = vmatpush1.msra.mxu0 0.0
      %573 = vmatprep.subr.mxu0 0.0
      %574 = vmatpush1.msra.mxu0 0.0
      %575 = vmatprep.subr.mxu0 0.0
      %576 = vmatpush1.msra.mxu0 0.0
      %577 = vmatprep.subr.mxu0 0.0
      %578 = vmatpush1.msra.mxu0 0.0
      %579 = vmatprep.subr.mxu0 0.0
      %580 = vmatpush1.msra.mxu0 0.0
      %581 = vmatprep.subr.mxu0 0.0
      %582 = vmatpush1.msra.mxu0 0.0
      %583 = vmatprep.subr.mxu0 0.0
      %584 = vmatpush1.msra.mxu0 0.0
      %585 = vmatprep.subr.mxu0 0.0
      %586 = vmatpush1.msra.mxu0 0.0
      %587 = vmatprep.subr.mxu0 0.0
      %588 = vmatpush1.msra.mxu0 0.0
      %589 = vmatprep.subr.mxu0 0.0
      %590 = vmatpush1.msra.mxu0 0.0
      %591 = vmatprep.subr.mxu0 0.0
      %592 = vmatpush1.msra.mxu0 0.0
      %593 = vmatprep.subr.mxu0 0.0
      %594 = vmatpush1.msra.mxu0 0.0
      %595 = vmatprep.subr.mxu0 0.0
      %596 = vmatpush1.msra.mxu0 0.0
      %597 = vmatprep.mubr.f32.mxu0 0.0
      %598 = vmatmul.mubr.f32.gmra.mrb[0].mxu0 %v515
      %v599 = vpop.f32.mrb[0].mxu0
      %v600 = vadd.f32 0.0, %v599
      %v601 = vpop.f32.mrb[0].mxu0
      %602 = vdwg.mxu0
      %603 = vmatprep.subr.mxu0 0.0
      %604 = vmatpush1.msra.mxu0 %v499
      %605 = vmatprep.subr.mxu0 0.0
      %606 = vmatpush1.msra.mxu0 %v500
      %607 = vmatprep.subr.mxu0 0.0
      %608 = vmatpush1.msra.mxu0 %v501
      %609 = vmatprep.subr.mxu0 0.0
      %610 = vmatpush1.msra.mxu0 %v502
      %611 = vmatprep.subr.mxu0 0.0
      %612 = vmatpush1.msra.mxu0 %v503
      %613 = vmatprep.subr.mxu0 0.0
      %614 = vmatpush1.msra.mxu0 %v504
      %615 = vmatprep.subr.mxu0 0.0
      %616 = vmatpush1.msra.mxu0 %v505
      %617 = vmatprep.subr.mxu0 0.0
      %618 = vmatpush1.msra.mxu0 %v506
      %619 = vmatprep.subr.mxu0 0.0
      %620 = vmatpush1.msra.mxu0 %v507
      %621 = vmatprep.subr.mxu0 0.0
      %622 = vmatpush1.msra.mxu0 %v508
      %623 = vmatprep.subr.mxu0 0.0
      %624 = vmatpush1.msra.mxu0 %v509
      %625 = vmatprep.subr.mxu0 0.0
      %626 = vmatpush1.msra.mxu0 %v510
      %627 = vmatprep.subr.mxu0 0.0
      %628 = vmatpush1.msra.mxu0 %v511
      %629 = vmatprep.subr.mxu0 0.0
      %630 = vmatpush1.msra.mxu0 %v512
      %631 = vmatprep.subr.mxu0 0.0
      %632 = vmatpush1.msra.mxu0 %v513
      %633 = vmatprep.subr.mxu0 0.0
      %634 = vmatpush1.msra.mxu0 %v514
      %635 = vmatprep.subr.mxu0 0.0
      %636 = vmatpush1.msra.mxu0 0.0
      %637 = vmatprep.subr.mxu0 0.0
      %638 = vmatpush1.msra.mxu0 0.0
      %639 = vmatprep.subr.mxu0 0.0
      %640 = vmatpush1.msra.mxu0 0.0
      %641 = vmatprep.subr.mxu0 0.0
      %642 = vmatpush1.msra.mxu0 0.0
      %643 = vmatprep.subr.mxu0 0.0
      %644 = vmatpush1.msra.mxu0 0.0
      %645 = vmatprep.subr.mxu0 0.0
      %646 = vmatpush1.msra.mxu0 0.0
      %647 = vmatprep.subr.mxu0 0.0
      %648 = vmatpush1.msra.mxu0 0.0
      %649 = vmatprep.subr.mxu0 0.0
      %650 = vmatpush1.msra.mxu0 0.0
      %651 = vmatprep.subr.mxu0 0.0
      %652 = vmatpush1.msra.mxu0 0.0
      %653 = vmatprep.subr.mxu0 0.0
      %654 = vmatpush1.msra.mxu0 0.0
      %655 = vmatprep.subr.mxu0 0.0
      %656 = vmatpush1.msra.mxu0 0.0
      %657 = vmatprep.subr.mxu0 0.0
      %658 = vmatpush1.msra.mxu0 0.0
      %659 = vmatprep.subr.mxu0 0.0
      %660 = vmatpush1.msra.mxu0 0.0
      %661 = vmatprep.subr.mxu0 0.0
      %662 = vmatpush1.msra.mxu0 0.0
      %663 = vmatprep.subr.mxu0 0.0
      %664 = vmatpush1.msra.mxu0 0.0
      %665 = vmatprep.subr.mxu0 0.0
      %666 = vmatpush1.msra.mxu0 0.0
      %667 = vmatprep.mubr.f32.mxu0 0.0
      %668 = vmatmul.mubr.f32.gmra.mrb[0].mxu0 %v498
      %v669 = vpop.f32.mrb[0].mxu0
      %v670 = vadd.f32 %v600, %v669
      %v671 = vpop.f32.mrb[0].mxu0
      %672 = vdwg.mxu0
      %v673 = vld [vmem:[#allocation2 + $0x2] sm:$0xff]
      %s674 = scalar_lea.vmem %s3, 256
      %v675 = vld [vmem:[%s674] sm:$0xff]
      %v676 = vld [vmem:[%s674 + $0x8] sm:$0xff]
      %v677 = vld [vmem:[%s674 + $0x10] sm:$0xff]
      %v678 = vld [vmem:[%s674 + $0x18] sm:$0xff]
      %v679 = vld [vmem:[%s674 + $0x20] sm:$0xff]
      %v680 = vld [vmem:[%s674 + $0x28] sm:$0xff]
      %v681 = vld [vmem:[%s674 + $0x30] sm:$0xff]
      %v682 = vld [vmem:[%s674 + $0x38] sm:$0xff]
      %v683 = vld [vmem:[%s674 + $0x40] sm:$0xff]
      %v684 = vld [vmem:[%s674 + $0x48] sm:$0xff]
      %v685 = vld [vmem:[%s674 + $0x50] sm:$0xff]
      %v686 = vld [vmem:[%s674 + $0x58] sm:$0xff]
      %v687 = vld [vmem:[%s674 + $0x60] sm:$0xff]
      %v688 = vld [vmem:[%s674 + $0x68] sm:$0xff]
      %v689 = vld [vmem:[%s674 + $0x70] sm:$0xff]
      %v690 = vld [vmem:[%s674 + $0x78] sm:$0xff]
      %691 = vmatprep.subr.mxu0 0.0
      %692 = vmatpush1.msra.mxu0 %v675
      %693 = vmatprep.subr.mxu0 0.0
      %694 = vmatpush1.msra.mxu0 %v676
      %695 = vmatprep.subr.mxu0 0.0
      %696 = vmatpush1.msra.mxu0 %v677
      %697 = vmatprep.subr.mxu0 0.0
      %698 = vmatpush1.msra.mxu0 %v678
      %699 = vmatprep.subr.mxu0 0.0
      %700 = vmatpush1.msra.mxu0 %v679
      %701 = vmatprep.subr.mxu0 0.0
      %702 = vmatpush1.msra.mxu0 %v680
      %703 = vmatprep.subr.mxu0 0.0
      %704 = vmatpush1.msra.mxu0 %v681
      %705 = vmatprep.subr.mxu0 0.0
      %706 = vmatpush1.msra.mxu0 %v682
      %707 = vmatprep.subr.mxu0 0.0
      %708 = vmatpush1.msra.mxu0 %v683
      %709 = vmatprep.subr.mxu0 0.0
      %710 = vmatpush1.msra.mxu0 %v684
      %711 = vmatprep.subr.mxu0 0.0
      %712 = vmatpush1.msra.mxu0 %v685
      %713 = vmatprep.subr.mxu0 0.0
      %714 = vmatpush1.msra.mxu0 %v686
      %715 = vmatprep.subr.mxu0 0.0
      %716 = vmatpush1.msra.mxu0 %v687
      %717 = vmatprep.subr.mxu0 0.0
      %718 = vmatpush1.msra.mxu0 %v688
      %719 = vmatprep.subr.mxu0 0.0
      %720 = vmatpush1.msra.mxu0 %v689
      %721 = vmatprep.subr.mxu0 0.0
      %722 = vmatpush1.msra.mxu0 %v690
      %723 = vmatprep.subr.mxu0 0.0
      %724 = vmatpush1.msra.mxu0 0.0
      %725 = vmatprep.subr.mxu0 0.0
      %726 = vmatpush1.msra.mxu0 0.0
      %727 = vmatprep.subr.mxu0 0.0
      %728 = vmatpush1.msra.mxu0 0.0
      %729 = vmatprep.subr.mxu0 0.0
      %730 = vmatpush1.msra.mxu0 0.0
      %731 = vmatprep.subr.mxu0 0.0
      %732 = vmatpush1.msra.mxu0 0.0
      %733 = vmatprep.subr.mxu0 0.0
      %734 = vmatpush1.msra.mxu0 0.0
      %735 = vmatprep.subr.mxu0 0.0
      %736 = vmatpush1.msra.mxu0 0.0
      %737 = vmatprep.subr.mxu0 0.0
      %738 = vmatpush1.msra.mxu0 0.0
      %739 = vmatprep.subr.mxu0 0.0
      %740 = vmatpush1.msra.mxu0 0.0
      %741 = vmatprep.subr.mxu0 0.0
      %742 = vmatpush1.msra.mxu0 0.0
      %743 = vmatprep.subr.mxu0 0.0
      %744 = vmatpush1.msra.mxu0 0.0
      %745 = vmatprep.subr.mxu0 0.0
      %746 = vmatpush1.msra.mxu0 0.0
      %747 = vmatprep.subr.mxu0 0.0
      %748 = vmatpush1.msra.mxu0 0.0
      %749 = vmatprep.subr.mxu0 0.0
      %750 = vmatpush1.msra.mxu0 0.0
      %751 = vmatprep.subr.mxu0 0.0
      %752 = vmatpush1.msra.mxu0 0.0
      %753 = vmatprep.subr.mxu0 0.0
      %754 = vmatpush1.msra.mxu0 0.0
      %755 = vmatprep.mubr.f32.mxu0 0.0
      %756 = vmatmul.mubr.f32.gmra.mrb[0].mxu0 %v673
      %v757 = vpop.f32.mrb[0].mxu0
      %v758 = vadd.f32 0.0, %v757
      %v759 = vpop.f32.mrb[0].mxu0
      %760 = vdwg.mxu0
      %v761 = vadd.f32 %v670, %v758
      %v762 = vld [vmem:[%s4] sm:$0x1]
      %v764 = vlaneseq
      %v765 = vshrl.u32 %v764, 7
      %v766 = vsub.s32 0, %v765
      %v767 = vrot.slane %v762, %v766
      %v769 = vadd.f32 %v761, %v767
      %v770 = vadd.f32 %v769, %v222
      %v771 = vmax.f32 %v770, 0.0
      %772 = vst [vmem:[%s219] sm:$0xff] %v771
      %p773 = scmp.lt.s32.totalorder %s16, 1
      %s774 = scalar_select %p773, %s16, 1
      %s775 = smul.addr %s774, 8
      %s776 = scalar_lea.vmem %s5, %s775
      // Predicated region
      $region41: #{basic_block_forward.1} parent=39 // pred_check
        %p777 = pneg %p144
      $region42: #{basic_block_forward.1} parent=39 // pred_check_branch
        %779 = sbr.rel (%p777) target = $region44
      $region43: #{basic_block_forward.1} parent=39 // pred_region
        _
      $region44: #{basic_block_forward.1} parent=39 // pred_fallthru
        _
    $region40: #{basic_block_forward.1} parent=5 // pred_fallthru
      _
    %p780 = scmp.le.s32.totalorder 2, %s11
    // Predicated region
    $region45: #{basic_block_forward.1} parent=5 // pred_check
      %p781 = pneg %p780
    $region46: #{basic_block_forward.1} parent=5 // pred_check_branch
      %783 = sbr.rel (%p781) target = $region48
    $region47: #{basic_block_forward.1} parent=5 // pred_region
      %s784 = ssub.s32 %s11, 2
      // Predicated region
      $region49: #{basic_block_forward.1} parent=47 // pred_check
        %p785 = pneg %p150
      $region50: #{basic_block_forward.1} parent=47 // pred_check_branch
        %787 = sbr.rel (%p785) target = $region52
      $region51: #{basic_block_forward.1} parent=47 // pred_region
        %p788 = scmp.lt.s32.totalorder %s17, 1
        %s789 = scalar_select %p788, %s17, 1
        %s790 = smul.addr %s789, 8
        %s791 = scalar_lea.vmem %s5, %s790
      $region52: #{basic_block_forward.1} parent=47 // pred_fallthru
        _
    $region48: #{basic_block_forward.1} parent=5 // pred_fallthru
      _
  $region6: #{basic_block_forward.1} parent=0 // loop_footer
    %s15 = sadd.s32 1, %s11
  $region7: #{basic_block_forward.1} parent=0 // loop_footer_branch
    %10 = sbr.rel target = $region3
  $region8: #{basic_block_forward.1} parent=0 // loop_exit
    _

</llo_original>
